<compile_context>
chip_gen: v5e
topology: v5e:2x2
jax: 0.10.0
libtpu: 0.0.40
codegen_flags: <defaults>
</compile_context>

<pallas_src>
import functools

import jax
import jax.numpy as jnp
from jax.experimental import pallas as pl
from jax.experimental.pallas import tpu as pltpu


def _round_up(n, m):
    return (n + m - 1) // m * m


def _ffn_swiglu_kernel(x_ref, w12_ref, b12_ref, w3_ref, b3_ref, o_ref,
                       acc_ref, *, th):
    """Grid = (row tiles, hidden tiles).

    x_ref  : (tm, Dp)      activation row tile (constant across hidden axis)
    w12_ref: (Dp, 2*th)    fused [fc | fc_act] weight tile (interleaved per h)
    b12_ref: (1, 2*th)     fused bias tile
    w3_ref : (th, Dp)      fc_out weight tile for this hidden slice
    b3_ref : (1, Dp)       fc_out bias
    o_ref  : (tm, Dp)      output row tile (written on last hidden step)
    acc_ref: (tm, Dp) f32  VMEM accumulator, persistent across hidden steps
    """
    h = pl.program_id(1)

    @pl.when(h == 0)
    def _init():
        acc_ref[...] = jnp.zeros_like(acc_ref)

    x = x_ref[...]

    # Single up-projection matmul for both gates: (tm, D) @ (D, 2*th) on MXU.
    hh = jnp.dot(x, w12_ref[...], preferred_element_type=jnp.float32)
    hh = hh + b12_ref[...].astype(jnp.float32)

    h_lin = hh[:, :th]
    h_act = hh[:, th:]
    # SwiGLU gate: lin * SiLU(act); sigmoid runs on the EUP, all in f32.
    gated = h_lin * (h_act * jax.nn.sigmoid(h_act))

    # Down-projection contribution of this hidden slice, accumulated in f32.
    acc_ref[...] += jnp.dot(gated.astype(w3_ref.dtype), w3_ref[...],
                            preferred_element_type=jnp.float32)

    @pl.when(h == pl.num_programs(1) - 1)
    def _finalize():
        out = acc_ref[...] + b3_ref[...].astype(jnp.float32)
        o_ref[...] = out.astype(o_ref.dtype)


def prepare_ffn_swiglu_params(w_fc, b_fc, w_act, b_act, w_out, b_out, *,
                              th=512, dtype=None):
    """One-time weight prep (do this at parameter-init time, NOT per forward).

    Inputs use PyTorch nn.Linear convention:
      w_fc, w_act: (H, D); b_fc, b_act: (H,); w_out: (D, H); b_out: (D,)
    Returns padded/fused/transposed operands for ffn_swiglu().
    Pass dtype=jnp.bfloat16 to feed the MXU bf16 operands on v6e/v7x.
    """
    if dtype is not None:
        w_fc, b_fc, w_act, b_act, w_out, b_out = (
            a.astype(dtype) for a in (w_fc, b_fc, w_act, b_act, w_out, b_out))

    hid, dim = w_fc.shape
    Dp = _round_up(dim, 128)                       # lane-dense output / matmul N
    th_eff = min(th, _round_up(hid, 128))          # hidden tile (mult of 128)
    Hp = _round_up(hid, th_eff)
    nH = Hp // th_eff

    def pad2(w, rows, cols):
        return jnp.pad(w, ((0, rows - w.shape[0]), (0, cols - w.shape[1])))

    w1 = pad2(w_fc.T, Dp, Hp)                      # (Dp, Hp)  fc
    w2 = pad2(w_act.T, Dp, Hp)                     # (Dp, Hp)  fc_act
    # Tile-interleave so grid block h holds [fc tile h | fc_act tile h].
    w12 = jnp.stack([w1.reshape(Dp, nH, th_eff),
                     w2.reshape(Dp, nH, th_eff)], axis=2).reshape(Dp, 2 * Hp)

    b1 = jnp.pad(b_fc, (0, Hp - hid))
    b2 = jnp.pad(b_act, (0, Hp - hid))
    b12 = jnp.stack([b1.reshape(nH, th_eff),
                     b2.reshape(nH, th_eff)], axis=1).reshape(1, 2 * Hp)

    w3 = pad2(w_out.T, Hp, Dp)                     # (Hp, Dp)
    b3 = jnp.pad(b_out, (0, Dp - dim)).reshape(1, Dp)

    return {"w12": w12, "b12": b12, "w3": w3, "b3": b3, "th": th_eff}


@functools.partial(jax.jit, static_argnames=("tm", "th"))
def _ffn_swiglu_impl(x2d, w12, b12, w3, b3, *, tm, th):
    T, dim = x2d.shape
    Dp = w12.shape[0]
    Hp = w3.shape[0]
    nH = Hp // th

    # Row tile: as large as the problem allows (multiple of 8 rows).
    tm_eff = min(tm, _round_up(max(T, 8), 8))
    Tp = _round_up(T, tm_eff)
    nT = Tp // tm_eff

    x_p = jnp.pad(x2d, ((0, Tp - T), (0, Dp - dim)))

    # VMEM budget: double-buffered blocks + accumulator, with headroom.
    isz = x_p.dtype.itemsize
    wsz = w12.dtype.itemsize
    blk_bytes = (tm_eff * Dp * isz          # x tile
                 + Dp * 2 * th * wsz        # w12 tile
                 + 8 * 2 * th * wsz         # b12 tile (sublane-padded)
                 + th * Dp * wsz            # w3 tile
                 + 8 * Dp * wsz             # b3
                 + tm_eff * Dp * isz)       # out tile
    acc_bytes = tm_eff * Dp * 4
    vmem_limit = min(100 * 1024 * 1024,
                     max(32 * 1024 * 1024,
                         2 * blk_bytes + acc_bytes + (8 << 20)))

    flops = 2 * Tp * Dp * (2 * Hp) + 2 * Tp * Hp * Dp
    bytes_accessed = (x_p.size * isz + w12.size * wsz + b12.size * wsz
                      + w3.size * wsz + b3.size * wsz + Tp * Dp * isz)

    kernel = functools.partial(_ffn_swiglu_kernel, th=th)

    out_p = pl.pallas_call(
        kernel,
        out_shape=jax.ShapeDtypeStruct((Tp, Dp), x2d.dtype),
        grid_spec=pltpu.PrefetchScalarGridSpec(
            num_scalar_prefetch=0,
            grid=(nT, nH),
            in_specs=[
                pl.BlockSpec((tm_eff, Dp), lambda i, h: (i, 0)),   # x
                pl.BlockSpec((Dp, 2 * th), lambda i, h: (0, h)),   # fused w12
                pl.BlockSpec((1, 2 * th), lambda i, h: (0, h)),    # fused b12
                pl.BlockSpec((th, Dp), lambda i, h: (h, 0)),       # w3
                pl.BlockSpec((1, Dp), lambda i, h: (0, 0)),        # b3
            ],
            out_specs=pl.BlockSpec((tm_eff, Dp), lambda i, h: (i, 0)),
            scratch_shapes=[pltpu.VMEM((tm_eff, Dp), jnp.float32)],
        ),
        compiler_params=pltpu.CompilerParams(
            dimension_semantics=("parallel", "arbitrary"),
            vmem_limit_bytes=int(vmem_limit)),
        cost_estimate=pl.CostEstimate(
            flops=int(flops),
            transcendentals=int(Tp * Hp),
            bytes_accessed=int(bytes_accessed)),
    )(x_p, w12, b12, w3, b3)

    return out_p[:T, :dim]


def ffn_swiglu(x, params, *, tm=256):
    """x: (..., dim). `params` from prepare_ffn_swiglu_params (done once)."""
    lead = x.shape[:-1]
    dim = x.shape[-1]
    x2d = x.reshape(-1, dim)
    y2d = _ffn_swiglu_impl(x2d, params["w12"], params["b12"], params["w3"],
                           params["b3"], tm=tm, th=params["th"])
    return y2d.reshape(*lead, dim)


def _init_linear(key, out_features, in_features, dtype=jnp.float32):
    """Deterministic init mimicking nn.Linear's uniform(-1/sqrt(in), 1/sqrt(in))."""
    kw, kb = jax.random.split(key)
    bound = 1.0 / (in_features ** 0.5)
    w = jax.random.uniform(kw, (out_features, in_features), dtype,
                           minval=-bound, maxval=bound)
    b = jax.random.uniform(kb, (out_features,), dtype,
                           minval=-bound, maxval=bound)
    return w, b


def _reference(x, w_fc, b_fc, w_act, b_act, w_out, b_out):
    h = (x @ w_fc.T + b_fc) * jax.nn.silu(x @ w_act.T + b_act)
    return h @ w_out.T + b_out


if __name__ == "__main__":
    batch, seq, dim, dim_ff_hidden = 2, 8, 32, 64

    key = jax.random.PRNGKey(0)
    kx, k1, k2, k3 = jax.random.split(key, 4)

    x = jax.random.normal(kx, (batch, seq, dim), jnp.float32)
    w_fc, b_fc = _init_linear(k1, dim_ff_hidden, dim)
    w_act, b_act = _init_linear(k2, dim_ff_hidden, dim)
    w_out, b_out = _init_linear(k3, dim, dim_ff_hidden)

    y_ref = _reference(x, w_fc, b_fc, w_act, b_act, w_out, b_out)

    # f32 path (tight numerical check, also exercises padding: D=32, T=16).
    params_f32 = prepare_ffn_swiglu_params(w_fc, b_fc, w_act, b_act,
                                           w_out, b_out)
    y = jax.block_until_ready(ffn_swiglu(x, params_f32, tm=256))
    assert y.shape == x.shape
    assert jnp.allclose(y, y_ref, atol=1e-5, rtol=1e-5), "f32 mismatch vs ref"

    # bf16 MXU-operand path (v6e/v7x recipe); accumulation stays f32.
    params_bf16 = prepare_ffn_swiglu_params(w_fc, b_fc, w_act, b_act,
                                            w_out, b_out, dtype=jnp.bfloat16)
    y_bf16 = jax.block_until_ready(
        ffn_swiglu(x.astype(jnp.bfloat16), params_bf16, tm=256))
    assert y_bf16.shape == x.shape
    assert jnp.allclose(y_bf16.astype(jnp.float32), y_ref,
                        atol=1e-1, rtol=1e-1), "bf16 mismatch vs ref"

    print("KERNEL_OK")
</pallas_src>

<mosaic_0001>
module attributes {stable_mosaic.version = 11 : i64} {
  func.func @_ffn_swiglu_kernel(%arg0: i32, %arg1: i32, %arg2: memref<16x128xf32, #tpu.memory_space<vmem>>, %arg3: memref<128x256xf32, #tpu.memory_space<vmem>>, %arg4: memref<1x256xf32, #tpu.memory_space<vmem>>, %arg5: memref<128x128xf32, #tpu.memory_space<vmem>>, %arg6: memref<1x128xf32, #tpu.memory_space<vmem>>, %arg7: memref<16x128xf32, #tpu.memory_space<vmem>>, %arg8: memref<16x128xf32, #tpu.memory_space<vmem>>) attributes {dimension_semantics = [#tpu.dimension_semantics<parallel>, #tpu.dimension_semantics<arbitrary>], iteration_bounds = array<i64: 1, 1>, scalar_prefetch = 0 : i64, scratch_operands = 1 : i64, tpu.core_type = #tpu.core_type<tc>, window_params = [{transform_indices = @transform_0, window_bounds = array<i64: 16, 128>}, {transform_indices = @transform_1, window_bounds = array<i64: 128, 256>}, {transform_indices = @transform_2, window_bounds = array<i64: 1, 256>}, {transform_indices = @transform_3, window_bounds = array<i64: 128, 128>}, {pipeline_mode = #tpu.pipeline_mode<synchronous>, transform_indices = @transform_4, window_bounds = array<i64: 1, 128>}, {transform_indices = @transform_5, window_bounds = array<i64: 16, 128>}]} {
    %c0_i32 = arith.constant 0 : i32
    %0 = arith.cmpi eq, %arg1, %c0_i32 : i32
    %1 = arith.extui %0 : i1 to i32
    %c0_i32_0 = arith.constant 0 : i32
    %2 = arith.cmpi ne, %1, %c0_i32_0 : i32
    scf.if %2 {
      %cst_16 = arith.constant 0.000000e+00 : f32
      %26 = vector.broadcast %cst_16 : f32 to vector<16x128xf32>
      %c0_17 = arith.constant 0 : index
      %c0_18 = arith.constant 0 : index
      %27 = vector.load %arg8[%c0_17, %c0_18] : memref<16x128xf32, #tpu.memory_space<vmem>>, vector<16x128xf32>
      tpu.vector_store %arg8[%c0_17, %c0_18], %26 {strides = array<i32>} : memref<16x128xf32, #tpu.memory_space<vmem>>, vector<16x128xf32>,
    } else {
    }
    %c0 = arith.constant 0 : index
    %c0_1 = arith.constant 0 : index
    %3 = vector.load %arg2[%c0, %c0_1] : memref<16x128xf32, #tpu.memory_space<vmem>>, vector<16x128xf32>
    %c0_2 = arith.constant 0 : index
    %c0_3 = arith.constant 0 : index
    %4 = vector.load %arg3[%c0_2, %c0_3] : memref<128x256xf32, #tpu.memory_space<vmem>>, vector<128x256xf32>
    %cst = arith.constant dense<0.000000e+00> : vector<16x256xf32>
    %5 = tpu.matmul %3, %4, %cst {dimension_numbers = #tpu.dot_dimension_numbers<[1], [0], [0], [1], [0, 0, 1, 1], [], []>} : vector<16x128xf32>, vector<128x256xf32>, vector<16x256xf32> -> vector<16x256xf32>
    %c0_4 = arith.constant 0 : index
    %c0_5 = arith.constant 0 : index
    %6 = vector.load %arg4[%c0_4, %c0_5] : memref<1x256xf32, #tpu.memory_space<vmem>>, vector<1x256xf32>
    %7 = vector.broadcast %6 : vector<1x256xf32> to vector<16x256xf32>
    %8 = arith.addf %5, %7 : vector<16x256xf32>
    %9 = vector.extract_strided_slice %8 {offsets = [0, 0], sizes = [16, 128], strides = [1, 1]} : vector<16x256xf32> to vector<16x128xf32>
    %10 = vector.extract_strided_slice %8 {offsets = [0, 128], sizes = [16, 128], strides = [1, 1]} : vector<16x256xf32> to vector<16x128xf32>
    %11 = arith.negf %10 : vector<16x128xf32>
    %12 = math.exp %11 : vector<16x128xf32>
    %cst_6 = arith.constant 1.000000e+00 : f32
    %13 = vector.broadcast %cst_6 : f32 to vector<16x128xf32>
    %14 = arith.addf %13, %12 : vector<16x128xf32>
    %15 = arith.divf %13, %14 : vector<16x128xf32>
    %16 = arith.mulf %10, %15 : vector<16x128xf32>
    %17 = arith.mulf %9, %16 : vector<16x128xf32>
    %c0_7 = arith.constant 0 : index
    %c0_8 = arith.constant 0 : index
    %18 = vector.load %arg8[%c0_7, %c0_8] : memref<16x128xf32, #tpu.memory_space<vmem>>, vector<16x128xf32>
    %c0_9 = arith.constant 0 : index
    %c0_10 = arith.constant 0 : index
    %19 = vector.load %arg5[%c0_9, %c0_10] : memref<128x128xf32, #tpu.memory_space<vmem>>, vector<128x128xf32>
    %cst_11 = arith.constant dense<0.000000e+00> : vector<16x128xf32>
    %20 = tpu.matmul %17, %19, %cst_11 {dimension_numbers = #tpu.dot_dimension_numbers<[1], [0], [0], [1], [0, 0, 1, 1], [], []>} : vector<16x128xf32>, vector<128x128xf32>, vector<16x128xf32> -> vector<16x128xf32>
    %21 = arith.addf %18, %20 : vector<16x128xf32>
    %c0_12 = arith.constant 0 : index
    %c0_13 = arith.constant 0 : index
    %22 = vector.load %arg8[%c0_12, %c0_13] : memref<16x128xf32, #tpu.memory_space<vmem>>, vector<16x128xf32>
    tpu.vector_store %arg8[%c0_12, %c0_13], %21 {strides = array<i32>} : memref<16x128xf32, #tpu.memory_space<vmem>>, vector<16x128xf32>,
    %c0_i32_14 = arith.constant 0 : i32
    %23 = arith.cmpi eq, %arg1, %c0_i32_14 : i32
    %24 = arith.extui %23 : i1 to i32
    %c0_i32_15 = arith.constant 0 : i32
    %25 = arith.cmpi ne, %24, %c0_i32_15 : i32
    scf.if %25 {
      %c0_16 = arith.constant 0 : index
      %c0_17 = arith.constant 0 : index
      %26 = vector.load %arg8[%c0_16, %c0_17] : memref<16x128xf32, #tpu.memory_space<vmem>>, vector<16x128xf32>
      %c0_18 = arith.constant 0 : index
      %c0_19 = arith.constant 0 : index
      %27 = vector.load %arg6[%c0_18, %c0_19] : memref<1x128xf32, #tpu.memory_space<vmem>>, vector<1x128xf32>
      %28 = vector.broadcast %27 : vector<1x128xf32> to vector<16x128xf32>
      %29 = arith.addf %26, %28 : vector<16x128xf32>
      %c0_20 = arith.constant 0 : index
      %c0_21 = arith.constant 0 : index
      %30 = vector.load %arg7[%c0_20, %c0_21] : memref<16x128xf32, #tpu.memory_space<vmem>>, vector<16x128xf32>
      tpu.vector_store %arg7[%c0_20, %c0_21], %29 {strides = array<i32>} : memref<16x128xf32, #tpu.memory_space<vmem>>, vector<16x128xf32>,
    } else {
    }
    return
  }
  func.func @transform_0(%arg0: i32, %arg1: i32) -> (i32, i32) {
    %c0_i32 = arith.constant 0 : i32
    %c0_i32_0 = arith.constant 0 : i32
    return %arg0, %c0_i32 : i32, i32
  }
  func.func @transform_1(%arg0: i32, %arg1: i32) -> (i32, i32) {
    %c0_i32 = arith.constant 0 : i32
    %c0_i32_0 = arith.constant 0 : i32
    return %c0_i32, %arg1 : i32, i32
  }
  func.func @transform_2(%arg0: i32, %arg1: i32) -> (i32, i32) {
    %c0_i32 = arith.constant 0 : i32
    %c0_i32_0 = arith.constant 0 : i32
    return %c0_i32, %arg1 : i32, i32
  }
  func.func @transform_3(%arg0: i32, %arg1: i32) -> (i32, i32) {
    %c0_i32 = arith.constant 0 : i32
    %c0_i32_0 = arith.constant 0 : i32
    return %arg1, %c0_i32 : i32, i32
  }
  func.func @transform_4(%arg0: i32, %arg1: i32) -> (i32, i32) {
    %c0_i32 = arith.constant 0 : i32
    %c0_i32_0 = arith.constant 0 : i32
    %c0_i32_1 = arith.constant 0 : i32
    return %c0_i32, %c0_i32_0 : i32, i32
  }
  func.func @transform_5(%arg0: i32, %arg1: i32) -> (i32, i32) {
    %c0_i32 = arith.constant 0 : i32
    %c0_i32_0 = arith.constant 0 : i32
    return %arg0, %c0_i32 : i32, i32
  }
}

</mosaic_0001>

<llo_original>
// kernel: _ffn_swiglu_impl.1
$region0: #{_ffn_swiglu_impl.1}
  #allocation0 [shape = 'u32[]', space=smem, size = 0x4, offset = 0x4, fixed_abs, tag = 'smem constant byte address 0x4 - core index']
  #allocation1 [shape = 'u32[72,128]{1,0:T(1,128)}', space=vmem, size = 0x9000, scoped, tag = 'internal scratch']
  #allocation2 [shape = 'f32[16,128]{1,0:T(8,128)}', space=vmem, size = 0x2000, scoped, tag = 'scratch operand']
  %s0 = inlined_call_operand.vmem [shape: f32[16,128], index: 0, kind: input, shape index: {}]
  %s1 = inlined_call_operand.hbm [shape: f32[128,256], index: 1, kind: input, shape index: {}]
  %s2 = inlined_call_operand.vmem [shape: f32[1,256], index: 2, kind: input, shape index: {}]
  %s3 = inlined_call_operand.hbm [shape: f32[128,128], index: 3, kind: input, shape index: {}]
  %s4 = inlined_call_operand.vmem [shape: f32[1,128], index: 4, kind: input, shape index: {}]
  %s5 = inlined_call_operand.hbm [shape: f32[16,128], index: 5, kind: output, shape index: {}]
  %s6 = sld [smem:[#allocation0]]
  $region46: #{_ffn_swiglu_impl.1} parent=0
    _
  %s8 = ssub.s32 1, %s6
  %s9 = scalar_select 0, %s8, %s6
  $region1: #{_ffn_swiglu_impl.1} parent=0
    #allocation3 [shape = 'u8[131072]{0}', space=vmem, size = 0x20000, scoped, tag = 'input window, operand 1, single buffered']
    #allocation4 [shape = 's32[1]{0}', space=sflag, size = 0x4, scoped, tag = 'scoped memory for _ffn_swiglu_impl.1']
    #allocation5 [shape = 's32[1]{0}', space=sflag, size = 0x4, scoped, tag = 'scoped memory for _ffn_swiglu_impl.1']
    #allocation6 [shape = 'u8[65536]{0}', space=vmem, size = 0x10000, scoped, tag = 'input window, operand 3, single buffered']
    #allocation7 [shape = 's32[1]{0}', space=sflag, size = 0x4, scoped, tag = 'scoped memory for _ffn_swiglu_impl.1']
    #allocation8 [shape = 'u8[8192]{0}', space=vmem, size = 0x2000, scoped, tag = 'output window, operand 0, single buffered']
    %10 = vsyncpa [#allocation4], 0
    %11 = vsyncpa [#allocation7], 0
    %12 = vsyncpa [#allocation5], 0
    // Predicated region
    $region2: #{_ffn_swiglu_impl.1} parent=1 // pred_check
      _
    $region3: #{_ffn_swiglu_impl.1} parent=1 // pred_check_branch
      %14 = sbr.rel (0) target = $region5
    $region4: #{_ffn_swiglu_impl.1} parent=1 // pred_region
      _
    $region5: #{_ffn_swiglu_impl.1} parent=1 // pred_fallthru
      _
    // Predicated region
    $region6: #{_ffn_swiglu_impl.1} parent=1 // pred_check
      _
    $region7: #{_ffn_swiglu_impl.1} parent=1 // pred_check_branch
      %16 = sbr.rel (0) target = $region9
    $region8: #{_ffn_swiglu_impl.1} parent=1 // pred_region
      %18 = vsyncadd [#allocation4], 0
      %s19 = sshll.u32 %s1, 4
      %s20 = int_to_ptr.hbm [resolvable:$true] %s19
      %s21 = sshll.u32 [#allocation3], 4
      %s22 = int_to_ptr.vmem [resolvable:$true] %s21
      %27 = dma.hbm_to_vmem [thread:$0]  %s20, 4096, %s22, [#allocation4], 256, 256, 16
    $region9: #{_ffn_swiglu_impl.1} parent=1 // pred_fallthru
      _
    // Predicated region
    $region10: #{_ffn_swiglu_impl.1} parent=1 // pred_check
      _
    $region11: #{_ffn_swiglu_impl.1} parent=1 // pred_check_branch
      %29 = sbr.rel (0) target = $region13
    $region12: #{_ffn_swiglu_impl.1} parent=1 // pred_region
      _
    $region13: #{_ffn_swiglu_impl.1} parent=1 // pred_fallthru
      _
    // Predicated region
    $region14: #{_ffn_swiglu_impl.1} parent=1 // pred_check
      _
    $region15: #{_ffn_swiglu_impl.1} parent=1 // pred_check_branch
      %31 = sbr.rel (0) target = $region17
    $region16: #{_ffn_swiglu_impl.1} parent=1 // pred_region
      %33 = vsyncadd [#allocation7], 0
      %s34 = sshll.u32 %s3, 4
      %s35 = int_to_ptr.hbm [resolvable:$true] %s34
      %s36 = sshll.u32 [#allocation6], 4
      %s37 = int_to_ptr.vmem [resolvable:$true] %s36
      %42 = dma.hbm_to_vmem [thread:$0]  %s35, 2048, %s37, [#allocation7], 128, 128, 8
    $region17: #{_ffn_swiglu_impl.1} parent=1 // pred_fallthru
      _
    // Predicated region
    $region18: #{_ffn_swiglu_impl.1} parent=1 // pred_check
      _
    $region19: #{_ffn_swiglu_impl.1} parent=1 // pred_check_branch
      %44 = sbr.rel (0) target = $region21
    $region20: #{_ffn_swiglu_impl.1} parent=1 // pred_region
      _
    $region21: #{_ffn_swiglu_impl.1} parent=1 // pred_fallthru
      _
    // Predicated region
    $region22: #{_ffn_swiglu_impl.1} parent=1 // pred_check
      _
    $region23: #{_ffn_swiglu_impl.1} parent=1 // pred_check_branch
      %46 = sbr.rel (0) target = $region25
    $region24: #{_ffn_swiglu_impl.1} parent=1 // pred_region
      %48 = dma.done [#allocation4], 4096
    $region25: #{_ffn_swiglu_impl.1} parent=1 // pred_fallthru
      _
    // Predicated region
    $region26: #{_ffn_swiglu_impl.1} parent=1 // pred_check
      _
    $region27: #{_ffn_swiglu_impl.1} parent=1 // pred_check_branch
      %50 = sbr.rel (0) target = $region29
    $region28: #{_ffn_swiglu_impl.1} parent=1 // pred_region
      %52 = dma.done [#allocation7], 2048
    $region29: #{_ffn_swiglu_impl.1} parent=1 // pred_fallthru
      _
    %p53 = scmp.eq.s32.totalorder 0, 0
    // Predicated region
    $region30: #{_ffn_swiglu_impl.1} parent=1 // pred_check
      %p54 = pneg %p53
    $region31: #{_ffn_swiglu_impl.1} parent=1 // pred_check_branch
      %56 = sbr.rel (%p54) target = $region33
    $region32: #{_ffn_swiglu_impl.1} parent=1 // pred_region
      %57 = vst [vmem:[#allocation2] sm:$0xff] 0.0
      %58 = vst [vmem:[#allocation2 + $0x8] sm:$0xff] 0.0
    $region33: #{_ffn_swiglu_impl.1} parent=1 // pred_fallthru
      _
    %v59 = vld [vmem:[%s0] sm:$0xff]
    %v60 = vld [vmem:[%s0 + $0x8] sm:$0xff]
    %v61 = vld [vmem:[#allocation3] sm:$0xff]
    %v62 = vld [vmem:[#allocation3 + $0x8] sm:$0xff]
    %v63 = vld [vmem:[#allocation3 + $0x10] sm:$0xff]
    %v64 = vld [vmem:[#allocation3 + $0x18] sm:$0xff]
    %v65 = vld [vmem:[#allocation3 + $0x20] sm:$0xff]
    %v66 = vld [vmem:[#allocation3 + $0x28] sm:$0xff]
    %v67 = vld [vmem:[#allocation3 + $0x30] sm:$0xff]
    %v68 = vld [vmem:[#allocation3 + $0x38] sm:$0xff]
    %v69 = vld [vmem:[#allocation3 + $0x40] sm:$0xff]
    %v70 = vld [vmem:[#allocation3 + $0x48] sm:$0xff]
    %v71 = vld [vmem:[#allocation3 + $0x50] sm:$0xff]
    %v72 = vld [vmem:[#allocation3 + $0x58] sm:$0xff]
    %v73 = vld [vmem:[#allocation3 + $0x60] sm:$0xff]
    %v74 = vld [vmem:[#allocation3 + $0x68] sm:$0xff]
    %v75 = vld [vmem:[#allocation3 + $0x70] sm:$0xff]
    %v76 = vld [vmem:[#allocation3 + $0x78] sm:$0xff]
    %v77 = vld [vmem:[#allocation3 + $0x80] sm:$0xff]
    %v78 = vld [vmem:[#allocation3 + $0x88] sm:$0xff]
    %v79 = vld [vmem:[#allocation3 + $0x90] sm:$0xff]
    %v80 = vld [vmem:[#allocation3 + $0x98] sm:$0xff]
    %v81 = vld [vmem:[#allocation3 + $0xa0] sm:$0xff]
    %v82 = vld [vmem:[#allocation3 + $0xa8] sm:$0xff]
    %v83 = vld [vmem:[#allocation3 + $0xb0] sm:$0xff]
    %v84 = vld [vmem:[#allocation3 + $0xb8] sm:$0xff]
    %v85 = vld [vmem:[#allocation3 + $0xc0] sm:$0xff]
    %v86 = vld [vmem:[#allocation3 + $0xc8] sm:$0xff]
    %v87 = vld [vmem:[#allocation3 + $0xd0] sm:$0xff]
    %v88 = vld [vmem:[#allocation3 + $0xd8] sm:$0xff]
    %v89 = vld [vmem:[#allocation3 + $0xe0] sm:$0xff]
    %v90 = vld [vmem:[#allocation3 + $0xe8] sm:$0xff]
    %v91 = vld [vmem:[#allocation3 + $0xf0] sm:$0xff]
    %v92 = vld [vmem:[#allocation3 + $0xf8] sm:$0xff]
    %v93 = vld [vmem:[%s2] sm:$0x3]
    %v95 = vperm.slane %v93, 0
    %v96 = vperm.slane %v93, 1
    %99 = vmatpush.msra.mxu0 %v91
    %100 = vmatpush.msra.mxu0 %v89
    %101 = vmatpush.msra.mxu0 %v87
    %102 = vmatpush.msra.mxu0 %v85
    %103 = vmatpush.msra.mxu0 %v83
    %104 = vmatpush.msra.mxu0 %v81
    %105 = vmatpush.msra.mxu0 %v79
    %106 = vmatpush.msra.mxu0 %v77
    %107 = vmatpush.msra.mxu0 %v75
    %108 = vmatpush.msra.mxu0 %v73
    %109 = vmatpush.msra.mxu0 %v71
    %110 = vmatpush.msra.mxu0 %v69
    %111 = vmatpush.msra.mxu0 %v67
    %112 = vmatpush.msra.mxu0 %v65
    %113 = vmatpush.msra.mxu0 %v63
    %114 = vmatpush.msra.mxu0 %v61
    %115 = vmatmul.f32.gmra.mxu0 %v59
    %v116 = vpop.f32.mrf.mxu0
    %v117 = vadd.f32 %v95, %v116
    %118 = vmatmul.f32.gmra.mxu0 %v60
    %v119 = vpop.f32.mrf.mxu0
    %v120 = vadd.f32 %v95, %v119
    %121 = vdwg.mxu0
    %122 = vmatpush.msra.mxu0 %v92
    %123 = vmatpush.msra.mxu0 %v90
    %124 = vmatpush.msra.mxu0 %v88
    %125 = vmatpush.msra.mxu0 %v86
    %126 = vmatpush.msra.mxu0 %v84
    %127 = vmatpush.msra.mxu0 %v82
    %128 = vmatpush.msra.mxu0 %v80
    %129 = vmatpush.msra.mxu0 %v78
    %130 = vmatpush.msra.mxu0 %v76
    %131 = vmatpush.msra.mxu0 %v74
    %132 = vmatpush.msra.mxu0 %v72
    %133 = vmatpush.msra.mxu0 %v70
    %134 = vmatpush.msra.mxu0 %v68
    %135 = vmatpush.msra.mxu0 %v66
    %136 = vmatpush.msra.mxu0 %v64
    %137 = vmatpush.msra.mxu0 %v62
    %138 = vmatmul.f32.gmra.mxu0 %v59
    %v139 = vpop.f32.mrf.mxu0
    %v140 = vadd.f32 %v96, %v139
    %141 = vmatmul.f32.gmra.mxu0 %v60
    %v142 = vpop.f32.mrf.mxu0
    %v143 = vadd.f32 %v96, %v142
    %144 = vdwg.mxu0
    %v145 = vxor.u32 %v140, 2147483648
    %v146 = vxor.u32 %v143, 2147483648
    %v147 = vmul.f32 %v145, 1.442695
    %v148 = vpow.pop %v147
    %v149 = vmul.f32 %v146, 1.442695
    %v150 = vpow.pop %v149
    %v151 = vadd.f32 %v148, 1.0
    %v152 = vadd.f32 %v150, 1.0
    %v153 = vrcp.pop %v151
    %v154 = vmul.f32 %v151, %v153
    %v155 = vsub.f32 1.0, %v154
    %v156 = vmul.f32 %v153, %v155
    %v157 = vadd.f32 %v153, %v156
    %vm158 = vweird.f32 %v151
    %vm159 = vweird.f32 %v153
    %vm160 = vmor %vm158, %vm159
    %v161 = vsel %vm160, %v153, %v157
    %v162 = vand.u32 2147483647, %v151
    %vm163 = vcmp.eq.f32.partialorder %v162, 8.507059e+37
    %v164 = vand.u32 %v151, 2147483648
    %v165 = vor.u32 1.1754944e-38, %v164
    %v166 = vsel %vm163, %v165, %v161
    %v167 = vmul.f32 1.0, %v166
    %v168 = vrcp.pop %v152
    %v169 = vmul.f32 %v152, %v168
    %v170 = vsub.f32 1.0, %v169
    %v171 = vmul.f32 %v168, %v170
    %v172 = vadd.f32 %v168, %v171
    %vm173 = vweird.f32 %v152
    %vm174 = vweird.f32 %v168
    %vm175 = vmor %vm173, %vm174
    %v176 = vsel %vm175, %v168, %v172
    %v177 = vand.u32 2147483647, %v152
    %vm178 = vcmp.eq.f32.partialorder %v177, 8.507059e+37
    %v179 = vand.u32 %v152, 2147483648
    %v180 = vor.u32 1.1754944e-38, %v179
    %v181 = vsel %vm178, %v180, %v176
    %v182 = vmul.f32 1.0, %v181
    %v183 = vmul.f32 %v140, %v167
    %v184 = vmul.f32 %v143, %v182
    %v185 = vmul.f32 %v117, %v183
    %v186 = vmul.f32 %v120, %v184
    %v187 = vld [vmem:[#allocation2] sm:$0xff]
    %v188 = vld [vmem:[#allocation2 + $0x8] sm:$0xff]
    %v189 = vld [vmem:[#allocation6] sm:$0xff]
    %v190 = vld [vmem:[#allocation6 + $0x8] sm:$0xff]
    %v191 = vld [vmem:[#allocation6 + $0x10] sm:$0xff]
    %v192 = vld [vmem:[#allocation6 + $0x18] sm:$0xff]
    %v193 = vld [vmem:[#allocation6 + $0x20] sm:$0xff]
    %v194 = vld [vmem:[#allocation6 + $0x28] sm:$0xff]
    %v195 = vld [vmem:[#allocation6 + $0x30] sm:$0xff]
    %v196 = vld [vmem:[#allocation6 + $0x38] sm:$0xff]
    %v197 = vld [vmem:[#allocation6 + $0x40] sm:$0xff]
    %v198 = vld [vmem:[#allocation6 + $0x48] sm:$0xff]
    %v199 = vld [vmem:[#allocation6 + $0x50] sm:$0xff]
    %v200 = vld [vmem:[#allocation6 + $0x58] sm:$0xff]
    %v201 = vld [vmem:[#allocation6 + $0x60] sm:$0xff]
    %v202 = vld [vmem:[#allocation6 + $0x68] sm:$0xff]
    %v203 = vld [vmem:[#allocation6 + $0x70] sm:$0xff]
    %v204 = vld [vmem:[#allocation6 + $0x78] sm:$0xff]
    %205 = vmatpush.msra.mxu0 %v204
    %206 = vmatpush.msra.mxu0 %v203
    %207 = vmatpush.msra.mxu0 %v202
    %208 = vmatpush.msra.mxu0 %v201
    %209 = vmatpush.msra.mxu0 %v200
    %210 = vmatpush.msra.mxu0 %v199
    %211 = vmatpush.msra.mxu0 %v198
    %212 = vmatpush.msra.mxu0 %v197
    %213 = vmatpush.msra.mxu0 %v196
    %214 = vmatpush.msra.mxu0 %v195
    %215 = vmatpush.msra.mxu0 %v194
    %216 = vmatpush.msra.mxu0 %v193
    %217 = vmatpush.msra.mxu0 %v192
    %218 = vmatpush.msra.mxu0 %v191
    %219 = vmatpush.msra.mxu0 %v190
    %220 = vmatpush.msra.mxu0 %v189
    %221 = vmatmul.f32.gmra.mxu0 %v185
    %v222 = vpop.f32.mrf.mxu0
    %v223 = vadd.f32 0.0, %v222
    %224 = vmatmul.f32.gmra.mxu0 %v186
    %v225 = vpop.f32.mrf.mxu0
    %v226 = vadd.f32 0.0, %v225
    %227 = vdwg.mxu0
    %v228 = vadd.f32 %v187, %v223
    %v229 = vadd.f32 %v188, %v226
    %230 = vst [vmem:[#allocation2] sm:$0xff] %v228
    %231 = vst [vmem:[#allocation2 + $0x8] sm:$0xff] %v229
    // Predicated region
    $region34: #{_ffn_swiglu_impl.1} parent=1 // pred_check
      %p232 = pneg %p53
    $region35: #{_ffn_swiglu_impl.1} parent=1 // pred_check_branch
      %234 = sbr.rel (%p232) target = $region37
    $region36: #{_ffn_swiglu_impl.1} parent=1 // pred_region
      %v235 = vld [vmem:[#allocation2] sm:$0xff]
      %v236 = vld [vmem:[#allocation2 + $0x8] sm:$0xff]
      %v237 = vld [vmem:[%s4] sm:$0x1]
      %v239 = vperm.slane %v237, 0
      %v241 = vadd.f32 %v235, %v239
      %v242 = vadd.f32 %v236, %v239
      %243 = vst [vmem:[#allocation8] sm:$0xff] %v241
      %244 = vst [vmem:[#allocation8 + $0x8] sm:$0xff] %v242
    $region37: #{_ffn_swiglu_impl.1} parent=1 // pred_fallthru
      _
    // Predicated region
    $region38: #{_ffn_swiglu_impl.1} parent=1 // pred_check
      _
    $region39: #{_ffn_swiglu_impl.1} parent=1 // pred_check_branch
      %246 = sbr.rel (0) target = $region41
    $region40: #{_ffn_swiglu_impl.1} parent=1 // pred_region
      %248 = vsyncadd [#allocation5], 0
      %s249 = sshll.u32 [#allocation8], 4
      %s250 = int_to_ptr.vmem [resolvable:$true] %s249
      %s251 = sshll.u32 %s5, 4
      %s252 = int_to_ptr.hbm [resolvable:$true] %s251
      %257 = dma.vmem_to_hbm [thread:$0]  %s250, 256, %s252, [#allocation5], 128, 128, 8
    $region41: #{_ffn_swiglu_impl.1} parent=1 // pred_fallthru
      _
    // Predicated region
    $region42: #{_ffn_swiglu_impl.1} parent=1 // pred_check
      _
    $region43: #{_ffn_swiglu_impl.1} parent=1 // pred_check_branch
      %259 = sbr.rel (0) target = $region45
    $region44: #{_ffn_swiglu_impl.1} parent=1 // pred_region
      %261 = dma.done [#allocation5], 256
    $region45: #{_ffn_swiglu_impl.1} parent=1 // pred_fallthru
      _
    %262 = vsyncpa [#allocation4], 1
    %263 = vsyncpa [#allocation7], 1
    %264 = vsyncpa [#allocation5], 1

</llo_original>
